<compile_context>
chip_gen: v7x
topology: tpu7x:2x2x1
jax: 0.10.0
libtpu: 0.0.40
codegen_flags: <defaults>
</compile_context>

<pallas_src>
import functools

import jax
import jax.numpy as jnp
from jax.experimental import pallas as pl
from jax.experimental.pallas import tpu as pltpu

_TWO_PI = 2.0 * jnp.pi


def _complexifier_kernel(x_ref, w_ref, b_ref, out_ref):
    """One row-tile of the Complexifier forward.

    x_ref:   (TN, D) f32 VMEM  -- input rows (D on the lane axis)
    w_ref:   (8,  D) f32 VMEM  -- fused weights; row 0 = Wm, row 1 = Wp, rest 0
    b_ref:   (2,)    f32 SMEM  -- [bm, bp] scalars
    out_ref: (2, TN) f32 VMEM  -- row 0 = real, row 1 = imag (lane-dense)
    """
    xr = jnp.maximum(x_ref[...], 0.0)                       # input ReLU (VPU)

    # Fused linear heads:  logits[j, n] = sum_d W[j, d] * xr[n, d]
    # i.e. W @ X^T (natively supported transposed-RHS MXU form).  Result is
    # (8, TN) with the row index on the 128-lane axis -> dense EUP work below.
    logits = jax.lax.dot_general(
        w_ref[...], xr,
        dimension_numbers=(((1,), (1,)), ((), ())),
        preferred_element_type=jnp.float32)                 # (8, TN)

    mag = jnp.maximum(logits[0:1, :] + b_ref[0], 0.0)       # (1, TN) ReLU head
    phase = _TWO_PI * jax.nn.sigmoid(logits[1:2, :] + b_ref[1])  # (1, TN)

    real = mag * jnp.cos(phase)                             # (1, TN)
    imag = mag * jnp.sin(phase)                             # (1, TN)
    out_ref[...] = jnp.concatenate([real, imag], axis=0)    # single (2, TN) store


def _round_up(x, m):
    return (x + m - 1) // m * m


@functools.partial(jax.jit, static_argnames=("tile_rows",))
def complexifier_forward(x, wm, bm, wp, bp, *, tile_rows=8192):
    """x: (B, 1, F, D) float32. Returns complex64 of shape (B, 1, F, 1)."""
    B, one, F, D = x.shape
    assert one == 1
    N = B * one * F

    x2d = x.reshape(N, D).astype(jnp.float32)

    # Fused weights in nn.Linear (out_features, in_features) orientation:
    # row 0 = magnitude head, row 1 = phase head; padded to 8 rows (sublane
    # count) with zeros.  Biases are passed as two scalars through SMEM.
    w2 = jnp.concatenate(
        [wm.reshape(1, D), wp.reshape(1, D)], axis=0).astype(jnp.float32)
    w8 = jnp.pad(w2, ((0, 6), (0, 0)))                                  # (8, D)
    b2 = jnp.stack([bm.reshape(()), bp.reshape(())]).astype(jnp.float32)  # (2,)

    # Row padding / tiling: pad N up to a sublane multiple and grid over big
    # row tiles so the HBM->VMEM DMA pipelines against compute.
    n_pad = _round_up(N, 8)
    if n_pad > tile_rows:
        tn = tile_rows                      # multiple of 8 and 128
        n_pad = _round_up(n_pad, tn)
    else:
        tn = n_pad                          # single full-array tile
    if n_pad != N:
        x2d = jnp.pad(x2d, ((0, n_pad - N), (0, 0)))

    grid = (n_pad // tn,)

    out = pl.pallas_call(
        _complexifier_kernel,
        out_shape=jax.ShapeDtypeStruct((2, n_pad), jnp.float32),
        grid=grid,
        in_specs=[
            pl.BlockSpec((tn, D), lambda i: (i, 0)),            # streamed rows
            pl.BlockSpec((8, D), lambda i: (0, 0)),             # resident weights
            pl.BlockSpec(memory_space=pltpu.MemorySpace.SMEM),  # scalar biases
        ],
        out_specs=pl.BlockSpec((2, tn), lambda i: (0, i)),      # lane-dense out
        compiler_params=pltpu.CompilerParams(
            dimension_semantics=("parallel",)),
        cost_estimate=pl.CostEstimate(
            flops=4 * n_pad * D,
            transcendentals=3 * n_pad,
            bytes_accessed=4 * n_pad * D + 8 * n_pad + 32 * D + 8),
    )(x2d, w8, b2)

    real = out[0, :N]
    imag = out[1, :N]
    return jax.lax.complex(real, imag).reshape(B, 1, F, 1)     # complex64


def _reference_forward(x, wm, bm, wp, bp):
    # Pure-JAX reference mirroring the PyTorch module.
    xr = jnp.maximum(x, 0.0)
    mag = jnp.maximum(
        jnp.einsum('bofd,d->bof', xr, wm.reshape(-1))[..., None] + bm, 0.0)
    ph = 2.0 * jnp.pi * jax.nn.sigmoid(
        jnp.einsum('bofd,d->bof', xr, wp.reshape(-1))[..., None] + bp)
    return jax.lax.complex(mag * jnp.cos(ph), mag * jnp.sin(ph))


if __name__ == "__main__":
    B, F, D = 2, 16, 32   # (B, 1, F, input_dim) with input_dim = 32

    key = jax.random.PRNGKey(0)
    kx, kwm, kbm, kwp, kbp = jax.random.split(key, 5)

    x = jax.random.normal(kx, (B, 1, F, D), dtype=jnp.float32)

    # Deterministic nn.Linear-style init: U(-1/sqrt(D), 1/sqrt(D))
    bound = 1.0 / jnp.sqrt(jnp.float32(D))
    wm = jax.random.uniform(kwm, (D,), jnp.float32, -bound, bound)
    bm = jax.random.uniform(kbm, (), jnp.float32, -bound, bound)
    wp = jax.random.uniform(kwp, (D,), jnp.float32, -bound, bound)
    bp = jax.random.uniform(kbp, (), jnp.float32, -bound, bound)

    out = complexifier_forward(x, wm, bm, wp, bp)
    out = jax.block_until_ready(out)
    ref = _reference_forward(x, wm, bm, wp, bp)
    assert out.shape == (B, 1, F, 1) and out.dtype == jnp.complex64
    assert jnp.allclose(out, ref, atol=1e-5, rtol=1e-5)

    # Exercise the row-padding + multi-tile grid path as well.
    B2, F2 = 2, 101       # N = 202 -> padded to 256 with 128-row tiles, grid=2
    x2 = jax.random.normal(jax.random.PRNGKey(1), (B2, 1, F2, D), jnp.float32)
    out2 = complexifier_forward(x2, wm, bm, wp, bp, tile_rows=128)
    out2 = jax.block_until_ready(out2)
    ref2 = _reference_forward(x2, wm, bm, wp, bp)
    assert out2.shape == (B2, 1, F2, 1) and out2.dtype == jnp.complex64
    assert jnp.allclose(out2, ref2, atol=1e-5, rtol=1e-5)

    print("KERNEL_OK")
</pallas_src>

<mosaic_0001>
module attributes {stable_mosaic.version = 11 : i64} {
  func.func @_complexifier_kernel(%arg0: i32, %arg1: memref<32x32xf32, #tpu.memory_space<vmem>>, %arg2: memref<8x32xf32, #tpu.memory_space<vmem>>, %arg3: memref<2xf32, #tpu.memory_space<smem>>, %arg4: memref<2x32xf32, #tpu.memory_space<vmem>>) attributes {dimension_semantics = [#tpu.dimension_semantics<parallel>], iteration_bounds = array<i64: 1>, scalar_prefetch = 0 : i64, scratch_operands = 0 : i64, tpu.core_type = #tpu.core_type<tc>, window_params = [{transform_indices = @transform_0, window_bounds = array<i64: 32, 32>}, {pipeline_mode = #tpu.pipeline_mode<synchronous>, transform_indices = @transform_1, window_bounds = array<i64: 8, 32>}, {transform_indices = @transform_2, window_bounds = array<i64: 2>}, {transform_indices = @transform_3, window_bounds = array<i64: 2, 32>}]} {
    %c0 = arith.constant 0 : index
    %c0_0 = arith.constant 0 : index
    %0 = vector.load %arg1[%c0, %c0_0] : memref<32x32xf32, #tpu.memory_space<vmem>>, vector<32x32xf32>
    %cst = arith.constant 0.000000e+00 : f32
    %1 = vector.broadcast %cst : f32 to vector<32x32xf32>
    %2 = arith.maximumf %0, %1 : vector<32x32xf32>
    %c0_1 = arith.constant 0 : index
    %c0_2 = arith.constant 0 : index
    %3 = vector.load %arg2[%c0_1, %c0_2] : memref<8x32xf32, #tpu.memory_space<vmem>>, vector<8x32xf32>
    %cst_3 = arith.constant dense<0.000000e+00> : vector<8x32xf32>
    %4 = tpu.matmul %3, %2, %cst_3 {dimension_numbers = #tpu.dot_dimension_numbers<[1], [1], [0], [0], [0, 0, 1, 0], [], []>} : vector<8x32xf32>, vector<32x32xf32>, vector<8x32xf32> -> vector<8x32xf32>
    %5 = vector.extract_strided_slice %4 {offsets = [0, 0], sizes = [1, 32], strides = [1, 1]} : vector<8x32xf32> to vector<1x32xf32>
    %c0_4 = arith.constant 0 : index
    %6 = memref.load %arg3[%c0_4] : memref<2xf32, #tpu.memory_space<smem>>
    %7 = vector.broadcast %6 : f32 to vector<1x32xf32>
    %8 = arith.addf %5, %7 : vector<1x32xf32>
    %cst_5 = arith.constant 0.000000e+00 : f32
    %9 = vector.broadcast %cst_5 : f32 to vector<1x32xf32>
    %10 = arith.maximumf %8, %9 : vector<1x32xf32>
    %11 = vector.extract_strided_slice %4 {offsets = [1, 0], sizes = [1, 32], strides = [1, 1]} : vector<8x32xf32> to vector<1x32xf32>
    %c1 = arith.constant 1 : index
    %12 = memref.load %arg3[%c1] : memref<2xf32, #tpu.memory_space<smem>>
    %13 = vector.broadcast %12 : f32 to vector<1x32xf32>
    %14 = arith.addf %11, %13 : vector<1x32xf32>
    %15 = arith.negf %14 : vector<1x32xf32>
    %16 = math.exp %15 : vector<1x32xf32>
    %cst_6 = arith.constant 1.000000e+00 : f32
    %17 = vector.broadcast %cst_6 : f32 to vector<1x32xf32>
    %18 = arith.addf %17, %16 : vector<1x32xf32>
    %19 = arith.divf %17, %18 : vector<1x32xf32>
    %cst_7 = arith.constant 6.28318548 : f32
    %20 = vector.broadcast %cst_7 : f32 to vector<1x32xf32>
    %21 = arith.mulf %20, %19 : vector<1x32xf32>
    %22 = math.cos %21 : vector<1x32xf32>
    %23 = arith.mulf %10, %22 : vector<1x32xf32>
    %24 = math.sin %21 : vector<1x32xf32>
    %25 = arith.mulf %10, %24 : vector<1x32xf32>
    %26 = tpu.concatenate %23, %25 in 0 : vector<1x32xf32>, vector<1x32xf32> -> vector<2x32xf32>
    %c0_8 = arith.constant 0 : index
    %c0_9 = arith.constant 0 : index
    %27 = vector.load %arg4[%c0_8, %c0_9] : memref<2x32xf32, #tpu.memory_space<vmem>>, vector<2x32xf32>
    tpu.vector_store %arg4[%c0_8, %c0_9], %26 {strides = array<i32>} : memref<2x32xf32, #tpu.memory_space<vmem>>, vector<2x32xf32>,
    return
  }
  func.func @transform_0(%arg0: i32) -> (i32, i32) {
    %c0_i32 = arith.constant 0 : i32
    %c0_i32_0 = arith.constant 0 : i32
    return %arg0, %c0_i32 : i32, i32
  }
  func.func @transform_1(%arg0: i32) -> (i32, i32) {
    %c0_i32 = arith.constant 0 : i32
    %c0_i32_0 = arith.constant 0 : i32
    %c0_i32_1 = arith.constant 0 : i32
    return %c0_i32, %c0_i32_0 : i32, i32
  }
  func.func @transform_2(%arg0: i32) -> i32 {
    %c0_i32 = arith.constant 0 : i32
    %c0_i32_0 = arith.constant 0 : i32
    return %c0_i32 : i32
  }
  func.func @transform_3(%arg0: i32) -> (i32, i32) {
    %c0_i32 = arith.constant 0 : i32
    %c0_i32_0 = arith.constant 0 : i32
    return %c0_i32, %arg0 : i32, i32
  }
}

</mosaic_0001>

<llo_original>
// kernel: custom-call
$region0: #{custom-call}
  %s0 = inlined_call_operand.vmem [shape: f32[2,1,16,1], index: 0, kind: input, shape index: {}]
  %s1 = inlined_call_operand.vmem [shape: f32[2,1,16,1], index: 1, kind: input, shape index: {}]
  %s2 = inlined_call_operand.hbm [shape: c64[2,1,16,1], index: 2, kind: output, shape index: {}]
  %s3 = scalar_lea.hbm %s2, 32
  $region1: #{custom-call} parent=0
    #allocation0 [shape = 's32[1]{0}', space=sflag, size = 0x4, scoped, tag = 'scoped memory for custom-call']
    %4 = vsyncpa [#allocation0], 0
    %s5 = sshll.u32 %s0, 4
    %s6 = int_to_ptr.vmem [resolvable:$true] %s5
    %8 = dma.vmem_to_hbm [thread:$0]  %s6, 32, %s2, [#allocation0]
    %9 = dma.done [#allocation0], 32
    %10 = vsyncpa [#allocation0], 1
  $region2: #{custom-call} parent=0
    #allocation1 [shape = 's32[1]{0}', space=sflag, size = 0x4, scoped, tag = 'scoped memory for custom-call']
    %11 = vsyncpa [#allocation1], 0
    %s12 = sshll.u32 %s1, 4
    %s13 = int_to_ptr.vmem [resolvable:$true] %s12
    %15 = dma.vmem_to_hbm [thread:$0]  %s13, 32, %s3, [#allocation1]
    %16 = dma.done [#allocation1], 32
    %17 = vsyncpa [#allocation1], 1

// kernel: complexifier_forward.1
$region0: #{complexifier_forward.1}
  #allocation0 [shape = 'u32[]', space=smem, size = 0x4, offset = 0x4, fixed_abs, tag = 'smem constant byte address 0x4 - core index']
  #allocation1 [shape = 'u32[144,128]{1,0:T(1,128)}', space=vmem, size = 0x12000, scoped, tag = 'internal scratch']
  %s0 = inlined_call_operand.vmem [shape: f32[32,32], index: 0, kind: input, shape index: {}]
  %s1 = inlined_call_operand.vmem [shape: f32[8,32], index: 1, kind: input, shape index: {}]
  %s2 = inlined_call_operand.vmem [shape: f32[2], index: 2, kind: input, shape index: {}]
  %s3 = inlined_call_operand.vmem [shape: f32[2,32], index: 3, kind: output, shape index: {}]
  %s4 = sld [smem:[#allocation0]]
  $region26: #{complexifier_forward.1} parent=0
    _
  %s6 = ssub.s32 1, %s4
  %s7 = scalar_select 0, %s6, %s4
  $region1: #{complexifier_forward.1} parent=0
    #allocation2 [shape = 'u8[512]{0}', space=smem, size = 0x200, scoped, tag = 'input window, operand 2, single buffered']
    #allocation3 [shape = 's32[1]{0}', space=sflag, size = 0x4, scoped, tag = 'scoped memory for complexifier_forward.1']
    %8 = vsyncpa [#allocation3], 0
    // Predicated region
    $region2: #{complexifier_forward.1} parent=1 // pred_check
      _
    $region3: #{complexifier_forward.1} parent=1 // pred_check_branch
      %10 = sbr.rel (0) target = $region5
    $region4: #{complexifier_forward.1} parent=1 // pred_region
      _
    $region5: #{complexifier_forward.1} parent=1 // pred_fallthru
      _
    // Predicated region
    $region6: #{complexifier_forward.1} parent=1 // pred_check
      _
    $region7: #{complexifier_forward.1} parent=1 // pred_check_branch
      %12 = sbr.rel (0) target = $region9
    $region8: #{complexifier_forward.1} parent=1 // pred_region
      _
    $region9: #{complexifier_forward.1} parent=1 // pred_fallthru
      _
    // Predicated region
    $region10: #{complexifier_forward.1} parent=1 // pred_check
      _
    $region11: #{complexifier_forward.1} parent=1 // pred_check_branch
      %14 = sbr.rel (0) target = $region13
    $region12: #{complexifier_forward.1} parent=1 // pred_region
      %s16 = ssub.s32 16, 16
      %17 = vsyncadd [#allocation3], %s16
      %s19 = sshll.u32 %s2, 4
      %s20 = int_to_ptr.vmem [resolvable:$true] %s19
      %22 = dma.vmem_to_smem %s20, 16, [#allocation2], [#allocation3]
    $region13: #{complexifier_forward.1} parent=1 // pred_fallthru
      _
    // Predicated region
    $region14: #{complexifier_forward.1} parent=1 // pred_check
      _
    $region15: #{complexifier_forward.1} parent=1 // pred_check_branch
      %24 = sbr.rel (0) target = $region17
    $region16: #{complexifier_forward.1} parent=1 // pred_region
      %25 = dma.done [#allocation3], 16
    $region17: #{complexifier_forward.1} parent=1 // pred_fallthru
      _
    %26 = sfence
    %v27 = vld [vmem:[%s0] sm:$0xff]
    %v28 = vld [vmem:[%s0 + $0x8] sm:$0xff]
    %v29 = vld [vmem:[%s0 + $0x10] sm:$0xff]
    %v30 = vld [vmem:[%s0 + $0x18] sm:$0xff]
    %v31 = vmax.f32 %v27, 0.0
    %v32 = vmax.f32 %v28, 0.0
    %v33 = vmax.f32 %v29, 0.0
    %v34 = vmax.f32 %v30, 0.0
    %v35 = vld [vmem:[%s1] sm:$0xff]
    %vm36 = vcmask 261120
    %v38 = vsel %vm36, %v35, 0
    %v41 = vsel %vm36, %v31, 0
    %v44 = vsel %vm36, %v32, 0
    %v47 = vsel %vm36, %v33, 0
    %v50 = vsel %vm36, %v34, 0
    %52 = vmatprep.subr.mxu0 0.0
    %53 = vmatpush1.xpose.msra.mxu0 %v41
    %54 = vmatprep.subr.mxu0 0.0
    %55 = vmatpush1.xpose.msra.mxu0 %v44
    %56 = vmatprep.subr.mxu0 0.0
    %57 = vmatpush1.xpose.msra.mxu0 %v47
    %58 = vmatprep.subr.mxu0 0.0
    %59 = vmatpush1.xpose.msra.mxu0 %v50
    %60 = vmatprep.subr.mxu0 0.0
    %61 = vmatpush1.xpose.msra.mxu0 0.0
    %62 = vmatprep.subr.mxu0 0.0
    %63 = vmatpush1.xpose.msra.mxu0 0.0
    %64 = vmatprep.subr.mxu0 0.0
    %65 = vmatpush1.xpose.msra.mxu0 0.0
    %66 = vmatprep.subr.mxu0 0.0
    %67 = vmatpush1.xpose.msra.mxu0 0.0
    %68 = vmatprep.subr.mxu0 0.0
    %69 = vmatpush1.xpose.msra.mxu0 0.0
    %70 = vmatprep.subr.mxu0 0.0
    %71 = vmatpush1.xpose.msra.mxu0 0.0
    %72 = vmatprep.subr.mxu0 0.0
    %73 = vmatpush1.xpose.msra.mxu0 0.0
    %74 = vmatprep.subr.mxu0 0.0
    %75 = vmatpush1.xpose.msra.mxu0 0.0
    %76 = vmatprep.subr.mxu0 0.0
    %77 = vmatpush1.xpose.msra.mxu0 0.0
    %78 = vmatprep.subr.mxu0 0.0
    %79 = vmatpush1.xpose.msra.mxu0 0.0
    %80 = vmatprep.subr.mxu0 0.0
    %81 = vmatpush1.xpose.msra.mxu0 0.0
    %82 = vmatprep.subr.mxu0 0.0
    %83 = vmatpush1.xpose.msra.mxu0 0.0
    %84 = vmatprep.subr.mxu0 0.0
    %85 = vmatpush1.xpose.msra.mxu0 0.0
    %86 = vmatprep.subr.mxu0 0.0
    %87 = vmatpush1.xpose.msra.mxu0 0.0
    %88 = vmatprep.subr.mxu0 0.0
    %89 = vmatpush1.xpose.msra.mxu0 0.0
    %90 = vmatprep.subr.mxu0 0.0
    %91 = vmatpush1.xpose.msra.mxu0 0.0
    %92 = vmatprep.subr.mxu0 0.0
    %93 = vmatpush1.xpose.msra.mxu0 0.0
    %94 = vmatprep.subr.mxu0 0.0
    %95 = vmatpush1.xpose.msra.mxu0 0.0
    %96 = vmatprep.subr.mxu0 0.0
    %97 = vmatpush1.xpose.msra.mxu0 0.0
    %98 = vmatprep.subr.mxu0 0.0
    %99 = vmatpush1.xpose.msra.mxu0 0.0
    %100 = vmatprep.subr.mxu0 0.0
    %101 = vmatpush1.xpose.msra.mxu0 0.0
    %102 = vmatprep.subr.mxu0 0.0
    %103 = vmatpush1.xpose.msra.mxu0 0.0
    %104 = vmatprep.subr.mxu0 0.0
    %105 = vmatpush1.xpose.msra.mxu0 0.0
    %106 = vmatprep.subr.mxu0 0.0
    %107 = vmatpush1.xpose.msra.mxu0 0.0
    %108 = vmatprep.subr.mxu0 0.0
    %109 = vmatpush1.xpose.msra.mxu0 0.0
    %110 = vmatprep.subr.mxu0 0.0
    %111 = vmatpush1.xpose.msra.mxu0 0.0
    %112 = vmatprep.subr.mxu0 0.0
    %113 = vmatpush1.xpose.msra.mxu0 0.0
    %114 = vmatprep.subr.mxu0 0.0
    %115 = vmatpush1.xpose.msra.mxu0 0.0
    %116 = vmatprep.mubr.f32.mxu0 0.0
    %117 = vmatmul.mubr.f32.gmra.mrb[0].mxu0 %v38
    %v118 = vpop.f32.mrb[0].mxu0
    %v119 = vadd.f32 0.0, %v118
    %v120 = vpop.f32.mrb[0].mxu0
    %121 = vdwg.mxu0
    %s122 = sld [smem:[#allocation2]]
    %v123 = vstv %s122
    %v124 = vadd.f32 %v119, %v123
    %v125 = vmax.f32 %v124, 0.0
    %s126 = sld [smem:[#allocation2 + $0x1]]
    %v127 = vstv %s126
    %v128 = vadd.f32 %v119, %v127
    %v129 = vxor.u32 %v128, 2147483648
    %v130 = vmul.f32 %v129, 1.442695
    %v131 = vpow.pop %v130
    %v132 = vadd.f32 %v131, 1.0
    %v133 = vrcp.pop %v132
    %v134 = vmul.f32 1.0, %v133
    %v135 = vmul.f32 %v134, 6.2831855
    %v136 = vand.u32 2147483647, %v135
    %vm137 = vcmp.le.f32.partialorder %v136, 0.7853982
    %vm138 = vcmp.lt.s32.totalorder %v135, 0
    %v139 = vand.u32 %v135, 2139095040
    %v140 = vshrl.u32 %v139, 23
    %v141 = vsub.s32 %v140, 127
    %v142 = vand.u32 2147483647, %v135
    %v143 = vand.u32 %v142, 8388607
    %v144 = vor.u32 %v143, 8388608
    %v145 = vsub.s32 0, %v144
    %v146 = vadd.s32 %v141, 1
    %vm147 = vcmp.gt.s32.totalorder %v146, 0
    %v148 = vsel %vm147, %v146, 0
    %v149 = vshrl.u32 %v148, 5
    %v150 = vand.u32 %v148, 31
    %v151 = vsub.s32 32, %v150
    %v152 = vshrl.u32 683565275, %v151
    %v153 = vshll.u32 683565275, %v150
    %v154 = vshrl.u32 2475754826, %v151
    %v155 = vor.u32 %v153, %v154
    %v156 = vshll.u32 2475754826, %v150
    %v157 = vshrl.u32 2131351028, %v151
    %v158 = vor.u32 %v156, %v157
    %v159 = vshll.u32 2131351028, %v150
    %v160 = vshrl.u32 2102212464, %v151
    %v161 = vor.u32 %v159, %v160
    %v162 = vshll.u32 2102212464, %v150
    %v163 = vshrl.u32 920167782, %v151
    %v164 = vor.u32 %v162, %v163
    %v165 = vshll.u32 920167782, %v150
    %v166 = vshrl.u32 1326507024, %v151
    %v167 = vor.u32 %v165, %v166
    %vm168 = vcmp.lt.s32.totalorder %v149, 1
    %vm169 = vcmp.lt.s32.totalorder %v149, 2
    %vm170 = vcmp.lt.s32.totalorder %v149, 3
    %vm171 = vcmp.lt.s32.totalorder %v149, 4
    %v172 = vsel %vm168, %v152, %v155
    %v173 = vsel %vm171, %v161, 2102212464
    %v174 = vsel %vm170, %v158, %v173
    %v175 = vsel %vm169, %v172, %v174
    %v176 = vsel %vm168, %v155, %v158
    %v177 = vsel %vm171, %v164, 920167782
    %v178 = vsel %vm170, %v161, %v177
    %v179 = vsel %vm169, %v176, %v178
    %v180 = vsel %vm168, %v158, %v161
    %v181 = vsel %vm171, %v167, 1326507024
    %v182 = vsel %vm170, %v164, %v181
    %v183 = vsel %vm169, %v180, %v182
    %v184 = vshll.u32 %v144, 8
    %v185 = vmul.u32.u64.compose %v184, %v183
    %v186 = vextract.low.u32 %v185
    %v187 = vextract.high.u32 %v185
    %v188 = vmul.u32.u64.compose %v184, %v179
    %v189 = vextract.low.u32 %v188
    %v190 = vextract.high.u32 %v188
    %v191 = vmul.u32 %v184, %v175
    %v192 = vadd.s32 %v187, %v189
    %vm193 = vc.u32 %v187, %v189
    %v194 = vadd.s32 %v190, 1
    %v195 = vsel %vm193, %v194, %v190
    %v196 = vadd.s32 %v191, %v195
    %v197 = vadd.s32 %v196, 536870912
    %v198 = vshrl.u32 %v197, 30
    %v199 = vshll.u32 %v198, 30
    %v200 = vsub.s32 %v196, %v199
    %vm201 = vcmp.lt.s32.totalorder %v200, 0
    %v202 = vsub.s32 0, %v200
    %v203 = vsel %vm201, %v202, %v200
    %v204 = vclz %v203
    %v205 = vsub.s32 %v204, 2
    %vm206 = vcmp.gt.s32.totalorder 0, %v205
    %v207 = vsel %vm206, 0, %v205
    %v208 = vsub.s32 32, %v207
    %v209 = vshll.u32 %v200, %v207
    %v210 = vshrl.u32 %v192, %v208
    %v211 = vor.u32 %v209, %v210
    %v212 = vsub.s32 4294967266, %v207
    %v213 = vadd.s32 %v212, 127
    %v214 = vshll.u32 %v213, 23
    %v215 = vor.u32 4788187, %v214
    %v216 = vand.u32 2147483647, %v215
    %v218 = vcvt.s32.f32 %v211
    %v219 = vmul.f32 %v218, %v216
    %v220 = vxor.u32 %v219, 2147483648
    %v221 = vsel %vm138, %v220, %v219
    %v222 = vsub.s32 4, %v198
    %v223 = vsel %vm138, %v222, %v198
    %v224 = vsel %vm137, %v135, %v221
    %v225 = vsel %vm137, 0, %v223
    %v226 = vcosq.f32.pop %v224
    %v227 = vsinq.f32.pop %v224
    %vm228 = vweird.f32 %v135
    %v229 = vand.u32 %v225, 3
    %vm230 = vcmp.lt.s32.totalorder %v229, 2
    %vm231 = vcmp.eq.s32.totalorder %v229, 0
    %v232 = vxor.u32 %v227, 2147483648
    %v233 = vsel %vm231, %v226, %v232
    %vm234 = vcmp.eq.s32.totalorder %v229, 2
    %v235 = vxor.u32 %v226, 2147483648
    %v236 = vsel %vm234, %v235, %v227
    %v237 = vsel %vm230, %v233, %v236
    %v238 = vsel %vm228, nan, %v237
    %v240 = vrot.slane %v238, 1
    %v242 = vmul.f32 %v125, %v240
    %v243 = vand.u32 2147483647, %v135
    %vm244 = vcmp.le.f32.partialorder %v243, 0.7853982
    %vm245 = vcmp.lt.s32.totalorder %v135, 0
    %v246 = vand.u32 %v135, 2139095040
    %v247 = vshrl.u32 %v246, 23
    %v248 = vsub.s32 %v247, 127
    %v249 = vand.u32 2147483647, %v135
    %v250 = vand.u32 %v249, 8388607
    %v251 = vor.u32 %v250, 8388608
    %v252 = vsub.s32 0, %v251
    %v253 = vadd.s32 %v248, 1
    %vm254 = vcmp.gt.s32.totalorder %v253, 0
    %v255 = vsel %vm254, %v253, 0
    %v256 = vshrl.u32 %v255, 5
    %v257 = vand.u32 %v255, 31
    %v258 = vsub.s32 32, %v257
    %v259 = vshrl.u32 683565275, %v258
    %v260 = vshll.u32 683565275, %v257
    %v261 = vshrl.u32 2475754826, %v258
    %v262 = vor.u32 %v260, %v261
    %v263 = vshll.u32 2475754826, %v257
    %v264 = vshrl.u32 2131351028, %v258
    %v265 = vor.u32 %v263, %v264
    %v266 = vshll.u32 2131351028, %v257
    %v267 = vshrl.u32 2102212464, %v258
    %v268 = vor.u32 %v266, %v267
    %v269 = vshll.u32 2102212464, %v257
    %v270 = vshrl.u32 920167782, %v258
    %v271 = vor.u32 %v269, %v270
    %v272 = vshll.u32 920167782, %v257
    %v273 = vshrl.u32 1326507024, %v258
    %v274 = vor.u32 %v272, %v273
    %vm275 = vcmp.lt.s32.totalorder %v256, 1
    %vm276 = vcmp.lt.s32.totalorder %v256, 2
    %vm277 = vcmp.lt.s32.totalorder %v256, 3
    %vm278 = vcmp.lt.s32.totalorder %v256, 4
    %v279 = vsel %vm275, %v259, %v262
    %v280 = vsel %vm278, %v268, 2102212464
    %v281 = vsel %vm277, %v265, %v280
    %v282 = vsel %vm276, %v279, %v281
    %v283 = vsel %vm275, %v262, %v265
    %v284 = vsel %vm278, %v271, 920167782
    %v285 = vsel %vm277, %v268, %v284
    %v286 = vsel %vm276, %v283, %v285
    %v287 = vsel %vm275, %v265, %v268
    %v288 = vsel %vm278, %v274, 1326507024
    %v289 = vsel %vm277, %v271, %v288
    %v290 = vsel %vm276, %v287, %v289
    %v291 = vshll.u32 %v251, 8
    %v292 = vmul.u32.u64.compose %v291, %v290
    %v293 = vextract.low.u32 %v292
    %v294 = vextract.high.u32 %v292
    %v295 = vmul.u32.u64.compose %v291, %v286
    %v296 = vextract.low.u32 %v295
    %v297 = vextract.high.u32 %v295
    %v298 = vmul.u32 %v291, %v282
    %v299 = vadd.s32 %v294, %v296
    %vm300 = vc.u32 %v294, %v296
    %v301 = vadd.s32 %v297, 1
    %v302 = vsel %vm300, %v301, %v297
    %v303 = vadd.s32 %v298, %v302
    %v304 = vadd.s32 %v303, 536870912
    %v305 = vshrl.u32 %v304, 30
    %v306 = vshll.u32 %v305, 30
    %v307 = vsub.s32 %v303, %v306
    %vm308 = vcmp.lt.s32.totalorder %v307, 0
    %v309 = vsub.s32 0, %v307
    %v310 = vsel %vm308, %v309, %v307
    %v311 = vclz %v310
    %v312 = vsub.s32 %v311, 2
    %vm313 = vcmp.gt.s32.totalorder 0, %v312
    %v314 = vsel %vm313, 0, %v312
    %v315 = vsub.s32 32, %v314
    %v316 = vshll.u32 %v307, %v314
    %v317 = vshrl.u32 %v299, %v315
    %v318 = vor.u32 %v316, %v317
    %v319 = vsub.s32 4294967266, %v314
    %v320 = vadd.s32 %v319, 127
    %v321 = vshll.u32 %v320, 23
    %v322 = vor.u32 4788187, %v321
    %v323 = vand.u32 2147483647, %v322
    %v325 = vcvt.s32.f32 %v318
    %v326 = vmul.f32 %v325, %v323
    %v327 = vxor.u32 %v326, 2147483648
    %v328 = vsel %vm245, %v327, %v326
    %v329 = vsub.s32 4, %v305
    %v330 = vsel %vm245, %v329, %v305
    %v331 = vsel %vm244, %v135, %v328
    %v332 = vsel %vm244, 0, %v330
    %v333 = vcosq.f32.pop %v331
    %v334 = vsinq.f32.pop %v331
    %vm335 = vweird.f32 %v135
    %v336 = vadd.s32 %v332, 3
    %v337 = vand.u32 %v336, 3
    %vm338 = vcmp.lt.s32.totalorder %v337, 2
    %vm339 = vcmp.eq.s32.totalorder %v337, 0
    %v340 = vxor.u32 %v334, 2147483648
    %v341 = vsel %vm339, %v333, %v340
    %vm342 = vcmp.eq.s32.totalorder %v337, 2
    %v343 = vxor.u32 %v333, 2147483648
    %v344 = vsel %vm342, %v343, %v334
    %v345 = vsel %vm338, %v341, %v344
    %v346 = vsel %vm335, nan, %v345
    %v348 = vrot.slane %v346, 1
    %v350 = vmul.f32 %v125, %v348
    %v352 = vrot.slane %v350, 7
    %vm354 = vcmask 1040384
    %v355 = vsel %vm354, %v242, %v352
    %vm356 = vcmask 254976
    %357 = vst.msk [vmem:[%s3] sm:$0x3] %vm356, %v355
    // Predicated region
    $region18: #{complexifier_forward.1} parent=1 // pred_check
      _
    $region19: #{complexifier_forward.1} parent=1 // pred_check_branch
      %359 = sbr.rel (0) target = $region21
    $region20: #{complexifier_forward.1} parent=1 // pred_region
      _
    $region21: #{complexifier_forward.1} parent=1 // pred_fallthru
      _
    // Predicated region
    $region22: #{complexifier_forward.1} parent=1 // pred_check
      _
    $region23: #{complexifier_forward.1} parent=1 // pred_check_branch
      %361 = sbr.rel (0) target = $region25
    $region24: #{complexifier_forward.1} parent=1 // pred_region
      _
    $region25: #{complexifier_forward.1} parent=1 // pred_fallthru
      _
    %362 = vsyncpa [#allocation3], 1

</llo_original>
